<compile_context>
chip_gen: v7x
topology: tpu7x:2x2x1
jax: 0.10.0
libtpu: 0.0.40
codegen_flags: <defaults>
</compile_context>

<pallas_src>
import functools

import jax
import jax.numpy as jnp
from jax.experimental import pallas as pl
from jax.experimental.pallas import tpu as pltpu


def _round_up(x: int, m: int) -> int:
    return ((x + m - 1) // m) * m


def _mlp_kernel(x_ref, w1_ref, b1_ref, w2_ref, b2_ref, o_ref):
    # x:  (B_TILE, IN_PAD)  bf16     w1: (IN_PAD, HID_PAD)  bf16   b1: (1, HID_PAD) f32
    # w2: (HID_PAD, OUT_PAD) bf16    b2: (1, OUT_PAD) f32          o:  (B_TILE, OUT_PAD) f32
    h = jnp.dot(x_ref[...], w1_ref[...], preferred_element_type=jnp.float32)
    h = jnp.maximum(h + b1_ref[...], 0.0)                              # ReLU (f32 epilogue)
    y = jnp.dot(h.astype(jnp.bfloat16), w2_ref[...],
                preferred_element_type=jnp.float32)
    o_ref[...] = jnp.maximum(y + b2_ref[...], 0.0).astype(o_ref.dtype)  # ReLU


@functools.partial(jax.jit, static_argnames=("max_batch_tile",))
def mnist_model_nonlinear(x_nchw, w1_t, b1, w2_t, b2, *, max_batch_tile: int = 256):
    """Forward pass of MNISTModelNONLinear.

    x_nchw : (N, C, H, W) float32
    w1_t   : (in_features, hidden)   -- transposed from PyTorch (hidden, in)
    b1     : (hidden,)
    w2_t   : (hidden, out)           -- transposed from PyTorch (out, hidden)
    b2     : (out,)
    returns (N, out) float32
    """
    n = x_nchw.shape[0]
    in_features = x_nchw.shape[1] * x_nchw.shape[2] * x_nchw.shape[3]
    hidden = w1_t.shape[1]
    out_features = w2_t.shape[1]

    # Padded (lane/sublane aligned) problem sizes.
    in_pad = _round_up(in_features, 128)
    hid_pad = _round_up(hidden, 128)
    out_pad = _round_up(out_features, 128)           # lane-dense output store
    b_tile = min(max_batch_tile, _round_up(n, 8))    # batch tile (sublane aligned)
    n_pad = _round_up(n, b_tile)
    num_tiles = n_pad // b_tile

    # --- Glue (nn.Flatten equivalent + zero padding + bf16 casts for the MXU) ---
    x2d = x_nchw.reshape(n, in_features)
    x2d = jnp.pad(x2d, ((0, n_pad - n), (0, in_pad - in_features))).astype(jnp.bfloat16)

    w1p = jnp.pad(w1_t, ((0, in_pad - in_features), (0, hid_pad - hidden))).astype(jnp.bfloat16)
    b1p = jnp.pad(b1, (0, hid_pad - hidden)).reshape(1, hid_pad).astype(jnp.float32)
    w2p = jnp.pad(w2_t, ((0, hid_pad - hidden), (0, out_pad - out_features))).astype(jnp.bfloat16)
    b2p = jnp.pad(b2, (0, out_pad - out_features)).reshape(1, out_pad).astype(jnp.float32)

    # Advisory cost for XLA's scheduler around this small custom call.
    flops = 2 * n_pad * (in_pad * hid_pad + hid_pad * out_pad)
    bytes_accessed = (x2d.size * 2 + w1p.size * 2 + w2p.size * 2
                      + b1p.size * 4 + b2p.size * 4 + n_pad * out_pad * 4)
    cost = pl.CostEstimate(flops=flops, transcendentals=0, bytes_accessed=bytes_accessed)

    out_padded = pl.pallas_call(
        _mlp_kernel,
        out_shape=jax.ShapeDtypeStruct((n_pad, out_pad), jnp.float32),
        grid=(num_tiles,),
        in_specs=[
            pl.BlockSpec((b_tile, in_pad), lambda i: (i, 0)),     # x: streamed per batch tile
            pl.BlockSpec((in_pad, hid_pad), lambda i: (0, 0)),    # w1: VMEM-resident
            pl.BlockSpec((1, hid_pad), lambda i: (0, 0)),         # b1: VMEM-resident
            pl.BlockSpec((hid_pad, out_pad), lambda i: (0, 0)),   # w2: VMEM-resident
            pl.BlockSpec((1, out_pad), lambda i: (0, 0)),         # b2: VMEM-resident
        ],
        out_specs=pl.BlockSpec((b_tile, out_pad), lambda i: (i, 0)),
        compiler_params=pltpu.CompilerParams(
            dimension_semantics=("parallel",)),       # shard batch tiles across TCs (v7x)
        cost_estimate=cost,
    )(x2d, w1p, b1p, w2p, b2p)

    # Drop batch / lane padding.
    return out_padded[:n, :out_features]


def _reference(x_nchw, w1_t, b1, w2_t, b2):
    # Matches the kernel's numerics: bf16 matmul operands, f32 accumulation/epilogue.
    x2d = x_nchw.reshape(x_nchw.shape[0], -1)
    h = jnp.dot(x2d.astype(jnp.bfloat16), w1_t.astype(jnp.bfloat16),
                preferred_element_type=jnp.float32)
    h = jnp.maximum(h + b1, 0.0)
    y = jnp.dot(h.astype(jnp.bfloat16), w2_t.astype(jnp.bfloat16),
                preferred_element_type=jnp.float32)
    return jnp.maximum(y + b2, 0.0)


if __name__ == "__main__":
    # Small, module-consistent shapes: batch=8, C=1, H=W=16 -> input_layer=256,
    # hidden_layer=128, output_layer=16.
    N, C, H, W = 8, 1, 16, 16
    IN, HID, OUT = C * H * W, 128, 16

    key = jax.random.PRNGKey(0)
    kx, kw1, kb1, kw2, kb2 = jax.random.split(key, 5)

    x = jax.random.normal(kx, (N, C, H, W), dtype=jnp.float32)
    # Deterministic synthetic params (already transposed to (in, out)).
    w1_t = jax.random.normal(kw1, (IN, HID), dtype=jnp.float32) * 0.05
    b1 = jax.random.normal(kb1, (HID,), dtype=jnp.float32) * 0.05
    w2_t = jax.random.normal(kw2, (HID, OUT), dtype=jnp.float32) * 0.05
    b2 = jax.random.normal(kb2, (OUT,), dtype=jnp.float32) * 0.05

    out = mnist_model_nonlinear(x, w1_t, b1, w2_t, b2)
    out = jax.block_until_ready(out)

    ref = _reference(x, w1_t, b1, w2_t, b2)
    assert out.shape == (N, OUT)
    # bf16 matmul operands -> loosened tolerance vs. the f32-exact path.
    assert jnp.allclose(out, ref, atol=1e-2, rtol=1e-2), "mismatch vs reference"

    print("KERNEL_OK")
</pallas_src>

<mosaic_0001>
module attributes {stable_mosaic.version = 11 : i64} {
  func.func @_mlp_kernel(%arg0: i32, %arg1: memref<8x256xbf16, #tpu.memory_space<vmem>>, %arg2: memref<256x128xbf16, #tpu.memory_space<vmem>>, %arg3: memref<1x128xf32, #tpu.memory_space<vmem>>, %arg4: memref<128x128xbf16, #tpu.memory_space<vmem>>, %arg5: memref<1x128xf32, #tpu.memory_space<vmem>>, %arg6: memref<8x128xf32, #tpu.memory_space<vmem>>) attributes {dimension_semantics = [#tpu.dimension_semantics<parallel>], iteration_bounds = array<i64: 1>, scalar_prefetch = 0 : i64, scratch_operands = 0 : i64, tpu.core_type = #tpu.core_type<tc>, window_params = [{transform_indices = @transform_0, window_bounds = array<i64: 8, 256>}, {pipeline_mode = #tpu.pipeline_mode<synchronous>, transform_indices = @transform_1, window_bounds = array<i64: 256, 128>}, {pipeline_mode = #tpu.pipeline_mode<synchronous>, transform_indices = @transform_2, window_bounds = array<i64: 1, 128>}, {pipeline_mode = #tpu.pipeline_mode<synchronous>, transform_indices = @transform_3, window_bounds = array<i64: 128, 128>}, {pipeline_mode = #tpu.pipeline_mode<synchronous>, transform_indices = @transform_4, window_bounds = array<i64: 1, 128>}, {transform_indices = @transform_5, window_bounds = array<i64: 8, 128>}]} {
    %c0 = arith.constant 0 : index
    %c0_0 = arith.constant 0 : index
    %0 = vector.load %arg1[%c0, %c0_0] : memref<8x256xbf16, #tpu.memory_space<vmem>>, vector<8x256xbf16>
    %c0_1 = arith.constant 0 : index
    %c0_2 = arith.constant 0 : index
    %1 = vector.load %arg2[%c0_1, %c0_2] : memref<256x128xbf16, #tpu.memory_space<vmem>>, vector<256x128xbf16>
    %cst = arith.constant dense<0.000000e+00> : vector<8x128xf32>
    %2 = tpu.matmul %0, %1, %cst {dimension_numbers = #tpu.dot_dimension_numbers<[1], [0], [0], [1], [0, 0, 1, 1], [], []>} : vector<8x256xbf16>, vector<256x128xbf16>, vector<8x128xf32> -> vector<8x128xf32>
    %c0_3 = arith.constant 0 : index
    %c0_4 = arith.constant 0 : index
    %3 = vector.load %arg3[%c0_3, %c0_4] : memref<1x128xf32, #tpu.memory_space<vmem>>, vector<1x128xf32>
    %4 = vector.broadcast %3 : vector<1x128xf32> to vector<8x128xf32>
    %5 = arith.addf %2, %4 : vector<8x128xf32>
    %cst_5 = arith.constant 0.000000e+00 : f32
    %6 = vector.broadcast %cst_5 : f32 to vector<8x128xf32>
    %7 = arith.maximumf %5, %6 : vector<8x128xf32>
    %8 = arith.truncf %7 : vector<8x128xf32> to vector<8x128xbf16>
    %c0_6 = arith.constant 0 : index
    %c0_7 = arith.constant 0 : index
    %9 = vector.load %arg4[%c0_6, %c0_7] : memref<128x128xbf16, #tpu.memory_space<vmem>>, vector<128x128xbf16>
    %cst_8 = arith.constant dense<0.000000e+00> : vector<8x128xf32>
    %10 = tpu.matmul %8, %9, %cst_8 {dimension_numbers = #tpu.dot_dimension_numbers<[1], [0], [0], [1], [0, 0, 1, 1], [], []>} : vector<8x128xbf16>, vector<128x128xbf16>, vector<8x128xf32> -> vector<8x128xf32>
    %c0_9 = arith.constant 0 : index
    %c0_10 = arith.constant 0 : index
    %11 = vector.load %arg5[%c0_9, %c0_10] : memref<1x128xf32, #tpu.memory_space<vmem>>, vector<1x128xf32>
    %12 = vector.broadcast %11 : vector<1x128xf32> to vector<8x128xf32>
    %13 = arith.addf %10, %12 : vector<8x128xf32>
    %cst_11 = arith.constant 0.000000e+00 : f32
    %14 = vector.broadcast %cst_11 : f32 to vector<8x128xf32>
    %15 = arith.maximumf %13, %14 : vector<8x128xf32>
    %c0_12 = arith.constant 0 : index
    %c0_13 = arith.constant 0 : index
    %16 = vector.load %arg6[%c0_12, %c0_13] : memref<8x128xf32, #tpu.memory_space<vmem>>, vector<8x128xf32>
    tpu.vector_store %arg6[%c0_12, %c0_13], %15 {strides = array<i32>} : memref<8x128xf32, #tpu.memory_space<vmem>>, vector<8x128xf32>,
    return
  }
  func.func @transform_0(%arg0: i32) -> (i32, i32) {
    %c0_i32 = arith.constant 0 : i32
    %c0_i32_0 = arith.constant 0 : i32
    return %arg0, %c0_i32 : i32, i32
  }
  func.func @transform_1(%arg0: i32) -> (i32, i32) {
    %c0_i32 = arith.constant 0 : i32
    %c0_i32_0 = arith.constant 0 : i32
    %c0_i32_1 = arith.constant 0 : i32
    return %c0_i32, %c0_i32_0 : i32, i32
  }
  func.func @transform_2(%arg0: i32) -> (i32, i32) {
    %c0_i32 = arith.constant 0 : i32
    %c0_i32_0 = arith.constant 0 : i32
    %c0_i32_1 = arith.constant 0 : i32
    return %c0_i32, %c0_i32_0 : i32, i32
  }
  func.func @transform_3(%arg0: i32) -> (i32, i32) {
    %c0_i32 = arith.constant 0 : i32
    %c0_i32_0 = arith.constant 0 : i32
    %c0_i32_1 = arith.constant 0 : i32
    return %c0_i32, %c0_i32_0 : i32, i32
  }
  func.func @transform_4(%arg0: i32) -> (i32, i32) {
    %c0_i32 = arith.constant 0 : i32
    %c0_i32_0 = arith.constant 0 : i32
    %c0_i32_1 = arith.constant 0 : i32
    return %c0_i32, %c0_i32_0 : i32, i32
  }
  func.func @transform_5(%arg0: i32) -> (i32, i32) {
    %c0_i32 = arith.constant 0 : i32
    %c0_i32_0 = arith.constant 0 : i32
    return %arg0, %c0_i32 : i32, i32
  }
}

</mosaic_0001>

<llo_original>
// kernel: mnist_model_nonlinear.1
$region0: #{mnist_model_nonlinear.1}
  #allocation0 [shape = 'u32[]', space=smem, size = 0x4, offset = 0x4, fixed_abs, tag = 'smem constant byte address 0x4 - core index']
  #allocation1 [shape = 'u32[144,128]{1,0:T(1,128)}', space=vmem, size = 0x12000, scoped, tag = 'internal scratch']
  %s0 = inlined_call_operand.vmem [shape: bf16[8,256], index: 0, kind: input, shape index: {}]
  %s1 = inlined_call_operand.vmem [shape: bf16[256,128], index: 1, kind: input, shape index: {}]
  %s2 = inlined_call_operand.vmem [shape: f32[1,128], index: 2, kind: input, shape index: {}]
  %s3 = inlined_call_operand.vmem [shape: bf16[128,128], index: 3, kind: input, shape index: {}]
  %s4 = inlined_call_operand.vmem [shape: f32[1,128], index: 4, kind: input, shape index: {}]
  %s5 = inlined_call_operand.hbm [shape: f32[8,128], index: 5, kind: output, shape index: {}]
  %s6 = sld [smem:[#allocation0]]
  $region30: #{mnist_model_nonlinear.1} parent=0
    _
  %s8 = ssub.s32 1, %s6
  %s9 = scalar_select 0, %s8, %s6
  $region1: #{mnist_model_nonlinear.1} parent=0
    #allocation2 [shape = 'u8[4096]{0}', space=vmem, size = 0x1000, scoped, tag = 'output window, operand 0, single buffered']
    #allocation3 [shape = 's32[1]{0}', space=sflag, size = 0x4, scoped, tag = 'scoped memory for mnist_model_nonlinear.1']
    %10 = vsyncpa [#allocation3], 0
    // Predicated region
    $region2: #{mnist_model_nonlinear.1} parent=1 // pred_check
      _
    $region3: #{mnist_model_nonlinear.1} parent=1 // pred_check_branch
      %12 = sbr.rel (0) target = $region5
    $region4: #{mnist_model_nonlinear.1} parent=1 // pred_region
      _
    $region5: #{mnist_model_nonlinear.1} parent=1 // pred_fallthru
      _
    // Predicated region
    $region6: #{mnist_model_nonlinear.1} parent=1 // pred_check
      _
    $region7: #{mnist_model_nonlinear.1} parent=1 // pred_check_branch
      %14 = sbr.rel (0) target = $region9
    $region8: #{mnist_model_nonlinear.1} parent=1 // pred_region
      _
    $region9: #{mnist_model_nonlinear.1} parent=1 // pred_fallthru
      _
    // Predicated region
    $region10: #{mnist_model_nonlinear.1} parent=1 // pred_check
      _
    $region11: #{mnist_model_nonlinear.1} parent=1 // pred_check_branch
      %16 = sbr.rel (0) target = $region13
    $region12: #{mnist_model_nonlinear.1} parent=1 // pred_region
      _
    $region13: #{mnist_model_nonlinear.1} parent=1 // pred_fallthru
      _
    // Predicated region
    $region14: #{mnist_model_nonlinear.1} parent=1 // pred_check
      _
    $region15: #{mnist_model_nonlinear.1} parent=1 // pred_check_branch
      %18 = sbr.rel (0) target = $region17
    $region16: #{mnist_model_nonlinear.1} parent=1 // pred_region
      _
    $region17: #{mnist_model_nonlinear.1} parent=1 // pred_fallthru
      _
    // Predicated region
    $region18: #{mnist_model_nonlinear.1} parent=1 // pred_check
      _
    $region19: #{mnist_model_nonlinear.1} parent=1 // pred_check_branch
      %20 = sbr.rel (0) target = $region21
    $region20: #{mnist_model_nonlinear.1} parent=1 // pred_region
      _
    $region21: #{mnist_model_nonlinear.1} parent=1 // pred_fallthru
      _
    %v22 = vld [vmem:[%s0] sm:$0xff]
    %v23 = vld [vmem:[%s1] sm:$0xf]
    %v24 = vld [vmem:[%s1 + $0x4] sm:$0xf]
    %v25 = vld [vmem:[%s1 + $0x8] sm:$0xf]
    %v26 = vld [vmem:[%s1 + $0xc] sm:$0xf]
    %v27 = vld [vmem:[%s1 + $0x10] sm:$0xf]
    %v28 = vld [vmem:[%s1 + $0x14] sm:$0xf]
    %v29 = vld [vmem:[%s1 + $0x18] sm:$0xf]
    %v30 = vld [vmem:[%s1 + $0x1c] sm:$0xf]
    %v31 = vld [vmem:[%s1 + $0x20] sm:$0xf]
    %v32 = vld [vmem:[%s1 + $0x24] sm:$0xf]
    %v33 = vld [vmem:[%s1 + $0x28] sm:$0xf]
    %v34 = vld [vmem:[%s1 + $0x2c] sm:$0xf]
    %v35 = vld [vmem:[%s1 + $0x30] sm:$0xf]
    %v36 = vld [vmem:[%s1 + $0x34] sm:$0xf]
    %v37 = vld [vmem:[%s1 + $0x38] sm:$0xf]
    %v38 = vld [vmem:[%s1 + $0x3c] sm:$0xf]
    %v39 = vld [vmem:[%s1 + $0x40] sm:$0xf]
    %v40 = vld [vmem:[%s1 + $0x44] sm:$0xf]
    %v41 = vld [vmem:[%s1 + $0x48] sm:$0xf]
    %v42 = vld [vmem:[%s1 + $0x4c] sm:$0xf]
    %v43 = vld [vmem:[%s1 + $0x50] sm:$0xf]
    %v44 = vld [vmem:[%s1 + $0x54] sm:$0xf]
    %v45 = vld [vmem:[%s1 + $0x58] sm:$0xf]
    %v46 = vld [vmem:[%s1 + $0x5c] sm:$0xf]
    %v47 = vld [vmem:[%s1 + $0x60] sm:$0xf]
    %v48 = vld [vmem:[%s1 + $0x64] sm:$0xf]
    %v49 = vld [vmem:[%s1 + $0x68] sm:$0xf]
    %v50 = vld [vmem:[%s1 + $0x6c] sm:$0xf]
    %v51 = vld [vmem:[%s1 + $0x70] sm:$0xf]
    %v52 = vld [vmem:[%s1 + $0x74] sm:$0xf]
    %v53 = vld [vmem:[%s1 + $0x78] sm:$0xf]
    %v54 = vld [vmem:[%s1 + $0x7c] sm:$0xf]
    %v55 = vld [vmem:[%s2] sm:$0x1]
    %v57 = vlaneseq
    %v58 = vshrl.u32 %v57, 7
    %v59 = vsub.s32 0, %v58
    %v60 = vrot.slane %v55, %v59
    %v63 = vunpack.c.l.b16 %v22
    %v64 = vunpack.c.h.b16 %v22
    %v65 = vpack.c.b16 %v63, %v63
    %v66 = vpack.c.b16 %v64, %v64
    %v101 = vunpack.c.l.b16 %v23
    %v102 = vunpack.c.l.b16 %v24
    %v103 = vunpack.c.l.b16 %v25
    %v104 = vunpack.c.l.b16 %v26
    %v105 = vunpack.c.l.b16 %v27
    %v106 = vunpack.c.l.b16 %v28
    %v107 = vunpack.c.l.b16 %v29
    %v108 = vunpack.c.l.b16 %v30
    %v109 = vunpack.c.l.b16 %v31
    %v110 = vunpack.c.l.b16 %v32
    %v111 = vunpack.c.l.b16 %v33
    %v112 = vunpack.c.l.b16 %v34
    %v113 = vunpack.c.l.b16 %v35
    %v114 = vunpack.c.l.b16 %v36
    %v115 = vunpack.c.l.b16 %v37
    %v116 = vunpack.c.l.b16 %v38
    %v117 = vunpack.c.l.b16 %v39
    %v118 = vunpack.c.l.b16 %v40
    %v119 = vunpack.c.l.b16 %v41
    %v120 = vunpack.c.l.b16 %v42
    %v121 = vunpack.c.l.b16 %v43
    %v122 = vunpack.c.l.b16 %v44
    %v123 = vunpack.c.l.b16 %v45
    %v124 = vunpack.c.l.b16 %v46
    %v125 = vunpack.c.l.b16 %v47
    %v126 = vunpack.c.l.b16 %v48
    %v127 = vunpack.c.l.b16 %v49
    %v128 = vunpack.c.l.b16 %v50
    %v129 = vunpack.c.l.b16 %v51
    %v130 = vunpack.c.l.b16 %v52
    %v131 = vunpack.c.l.b16 %v53
    %v132 = vunpack.c.l.b16 %v54
    %v133 = vpack.c.b16 %v102, %v101
    %v134 = vpack.c.b16 %v104, %v103
    %v135 = vpack.c.b16 %v106, %v105
    %v136 = vpack.c.b16 %v108, %v107
    %v137 = vpack.c.b16 %v110, %v109
    %v138 = vpack.c.b16 %v112, %v111
    %v139 = vpack.c.b16 %v114, %v113
    %v140 = vpack.c.b16 %v116, %v115
    %v141 = vpack.c.b16 %v118, %v117
    %v142 = vpack.c.b16 %v120, %v119
    %v143 = vpack.c.b16 %v122, %v121
    %v144 = vpack.c.b16 %v124, %v123
    %v145 = vpack.c.b16 %v126, %v125
    %v146 = vpack.c.b16 %v128, %v127
    %v147 = vpack.c.b16 %v130, %v129
    %v148 = vpack.c.b16 %v132, %v131
    %165 = vmatprep.subr.bf16.mxu0 0
    %166 = vmatpush1.bf16.msra.mxu0 %v133
    %167 = vmatprep.subr.bf16.mxu0 0
    %168 = vmatpush1.bf16.msra.mxu0 %v134
    %169 = vmatprep.subr.bf16.mxu0 0
    %170 = vmatpush1.bf16.msra.mxu0 %v135
    %171 = vmatprep.subr.bf16.mxu0 0
    %172 = vmatpush1.bf16.msra.mxu0 %v136
    %173 = vmatprep.subr.bf16.mxu0 0
    %174 = vmatpush1.bf16.msra.mxu0 %v137
    %175 = vmatprep.subr.bf16.mxu0 0
    %176 = vmatpush1.bf16.msra.mxu0 %v138
    %177 = vmatprep.subr.bf16.mxu0 0
    %178 = vmatpush1.bf16.msra.mxu0 %v139
    %179 = vmatprep.subr.bf16.mxu0 0
    %180 = vmatpush1.bf16.msra.mxu0 %v140
    %181 = vmatprep.subr.bf16.mxu0 0
    %182 = vmatpush1.bf16.msra.mxu0 %v141
    %183 = vmatprep.subr.bf16.mxu0 0
    %184 = vmatpush1.bf16.msra.mxu0 %v142
    %185 = vmatprep.subr.bf16.mxu0 0
    %186 = vmatpush1.bf16.msra.mxu0 %v143
    %187 = vmatprep.subr.bf16.mxu0 0
    %188 = vmatpush1.bf16.msra.mxu0 %v144
    %189 = vmatprep.subr.bf16.mxu0 0
    %190 = vmatpush1.bf16.msra.mxu0 %v145
    %191 = vmatprep.subr.bf16.mxu0 0
    %192 = vmatpush1.bf16.msra.mxu0 %v146
    %193 = vmatprep.subr.bf16.mxu0 0
    %194 = vmatpush1.bf16.msra.mxu0 %v147
    %195 = vmatprep.subr.bf16.mxu0 0
    %196 = vmatpush1.bf16.msra.mxu0 %v148
    %197 = vmatprep.mubr.bf16.mxu0 %v66
    %198 = vmatmul.mubr.bf16.gmra.mrb[0].mxu0 %v65
    %v199 = vpop.f32.mrb[0].mxu0
    %v200 = vadd.f32 %v60, %v199
    %v201 = vpop.f32.mrb[0].mxu0
    %v202 = vpop.f32.mrb[0].mxu0
    %v203 = vpop.f32.mrb[0].mxu0
    %204 = vdwg.mxu0
    %v205 = vmax.f32 %v200, 0.0
    %v206 = vpack.c.bf16 %v205, %v205
    %v207 = vld [vmem:[%s3] sm:$0xf]
    %v208 = vld [vmem:[%s3 + $0x4] sm:$0xf]
    %v209 = vld [vmem:[%s3 + $0x8] sm:$0xf]
    %v210 = vld [vmem:[%s3 + $0xc] sm:$0xf]
    %v211 = vld [vmem:[%s3 + $0x10] sm:$0xf]
    %v212 = vld [vmem:[%s3 + $0x14] sm:$0xf]
    %v213 = vld [vmem:[%s3 + $0x18] sm:$0xf]
    %v214 = vld [vmem:[%s3 + $0x1c] sm:$0xf]
    %v215 = vld [vmem:[%s3 + $0x20] sm:$0xf]
    %v216 = vld [vmem:[%s3 + $0x24] sm:$0xf]
    %v217 = vld [vmem:[%s3 + $0x28] sm:$0xf]
    %v218 = vld [vmem:[%s3 + $0x2c] sm:$0xf]
    %v219 = vld [vmem:[%s3 + $0x30] sm:$0xf]
    %v220 = vld [vmem:[%s3 + $0x34] sm:$0xf]
    %v221 = vld [vmem:[%s3 + $0x38] sm:$0xf]
    %v222 = vld [vmem:[%s3 + $0x3c] sm:$0xf]
    %v223 = vld [vmem:[%s4] sm:$0x1]
    %v225 = vlaneseq
    %v226 = vshrl.u32 %v225, 7
    %v227 = vsub.s32 0, %v226
    %v228 = vrot.slane %v223, %v227
    %v246 = vunpack.c.l.b16 %v207
    %v247 = vunpack.c.l.b16 %v208
    %v248 = vunpack.c.l.b16 %v209
    %v249 = vunpack.c.l.b16 %v210
    %v250 = vunpack.c.l.b16 %v211
    %v251 = vunpack.c.l.b16 %v212
    %v252 = vunpack.c.l.b16 %v213
    %v253 = vunpack.c.l.b16 %v214
    %v254 = vunpack.c.l.b16 %v215
    %v255 = vunpack.c.l.b16 %v216
    %v256 = vunpack.c.l.b16 %v217
    %v257 = vunpack.c.l.b16 %v218
    %v258 = vunpack.c.l.b16 %v219
    %v259 = vunpack.c.l.b16 %v220
    %v260 = vunpack.c.l.b16 %v221
    %v261 = vunpack.c.l.b16 %v222
    %v262 = vpack.c.b16 %v247, %v246
    %v263 = vpack.c.b16 %v249, %v248
    %v264 = vpack.c.b16 %v251, %v250
    %v265 = vpack.c.b16 %v253, %v252
    %v266 = vpack.c.b16 %v255, %v254
    %v267 = vpack.c.b16 %v257, %v256
    %v268 = vpack.c.b16 %v259, %v258
    %v269 = vpack.c.b16 %v261, %v260
    %278 = vmatprep.subr.bf16.mxu0 0
    %279 = vmatpush1.bf16.msra.mxu0 %v262
    %280 = vmatprep.subr.bf16.mxu0 0
    %281 = vmatpush1.bf16.msra.mxu0 %v263
    %282 = vmatprep.subr.bf16.mxu0 0
    %283 = vmatpush1.bf16.msra.mxu0 %v264
    %284 = vmatprep.subr.bf16.mxu0 0
    %285 = vmatpush1.bf16.msra.mxu0 %v265
    %286 = vmatprep.subr.bf16.mxu0 0
    %287 = vmatpush1.bf16.msra.mxu0 %v266
    %288 = vmatprep.subr.bf16.mxu0 0
    %289 = vmatpush1.bf16.msra.mxu0 %v267
    %290 = vmatprep.subr.bf16.mxu0 0
    %291 = vmatpush1.bf16.msra.mxu0 %v268
    %292 = vmatprep.subr.bf16.mxu0 0
    %293 = vmatpush1.bf16.msra.mxu0 %v269
    %294 = vmatprep.subr.bf16.mxu0 0
    %295 = vmatpush1.bf16.msra.mxu0 0
    %296 = vmatprep.subr.bf16.mxu0 0
    %297 = vmatpush1.bf16.msra.mxu0 0
    %298 = vmatprep.subr.bf16.mxu0 0
    %299 = vmatpush1.bf16.msra.mxu0 0
    %300 = vmatprep.subr.bf16.mxu0 0
    %301 = vmatpush1.bf16.msra.mxu0 0
    %302 = vmatprep.subr.bf16.mxu0 0
    %303 = vmatpush1.bf16.msra.mxu0 0
    %304 = vmatprep.subr.bf16.mxu0 0
    %305 = vmatpush1.bf16.msra.mxu0 0
    %306 = vmatprep.subr.bf16.mxu0 0
    %307 = vmatpush1.bf16.msra.mxu0 0
    %308 = vmatprep.subr.bf16.mxu0 0
    %309 = vmatpush1.bf16.msra.mxu0 0
    %310 = vmatprep.mubr.bf16.mxu0 0
    %311 = vmatmul.mubr.bf16.gmra.mrb[0].mxu0 %v206
    %v312 = vpop.f32.mrb[0].mxu0
    %v313 = vadd.f32 %v228, %v312
    %v314 = vpop.f32.mrb[0].mxu0
    %v315 = vpop.f32.mrb[0].mxu0
    %v316 = vpop.f32.mrb[0].mxu0
    %317 = vdwg.mxu0
    %v318 = vmax.f32 %v313, 0.0
    %319 = vst [vmem:[#allocation2] sm:$0xff] %v318
    // Predicated region
    $region22: #{mnist_model_nonlinear.1} parent=1 // pred_check
      _
    $region23: #{mnist_model_nonlinear.1} parent=1 // pred_check_branch
      %321 = sbr.rel (0) target = $region25
    $region24: #{mnist_model_nonlinear.1} parent=1 // pred_region
      %s323 = ssub.s32 128, 128
      %324 = vsyncadd [#allocation3], %s323
      %s326 = sshll.u32 [#allocation2], 4
      %s327 = int_to_ptr.vmem [resolvable:$true] %s326
      %329 = dma.vmem_to_hbm [thread:$0]  %s327, 128, %s5, [#allocation3]
    $region25: #{mnist_model_nonlinear.1} parent=1 // pred_fallthru
      _
    // Predicated region
    $region26: #{mnist_model_nonlinear.1} parent=1 // pred_check
      _
    $region27: #{mnist_model_nonlinear.1} parent=1 // pred_check_branch
      %331 = sbr.rel (0) target = $region29
    $region28: #{mnist_model_nonlinear.1} parent=1 // pred_region
      %332 = dma.done [#allocation3], 128
    $region29: #{mnist_model_nonlinear.1} parent=1 // pred_fallthru
      _
    %333 = vsyncpa [#allocation3], 1

</llo_original>
